<compile_context>
chip_gen: v5e
topology: v5e:2x2
jax: 0.10.0
libtpu: 0.0.40
codegen_flags: <defaults>
</compile_context>

<pallas_src>
import jax
import jax.numpy as jnp
from jax.experimental import pallas as pl
from jax.experimental.pallas import tpu as pltpu

HIDDEN = 100      # logical hidden width of the backbone MLP
_LANE = 128       # TPU lane width (pad every feature dim to this)
_SUBLANE = 8      # f32/bf16-friendly sublane granularity


def _round_up(n: int, m: int) -> int:
    return (n + m - 1) // m * m


def _vmem_budget_bytes() -> int:
    """~3/4 of physical VMEM, capped at 64 MiB; safe 32 MiB fallback."""
    try:
        cap = int(pltpu.get_tpu_info().vmem_capacity_bytes)
    except Exception:
        return 32 << 20
    return max(32 << 20, min(64 << 20, (3 * cap) // 4))


def _min_batch_tiles() -> int:
    """v7x has 2 TensorCores per chip: prefer >=2 'parallel' batch tiles."""
    try:
        kind = jax.devices()[0].device_kind.lower()
    except Exception:
        return 1
    return 2 if "v7" in kind else 1


def _cap_block_batch(block_batch, in_dim, hid_p, out_p, vmem_budget):
    """Cap batch tile so double-buffered activations + weights fit VMEM."""
    per_row = 2 * in_dim * 2 + 2 * out_p * 2 + 2 * hid_p * 4     # x, out, h1/h2
    weights = (in_dim * hid_p + hid_p * hid_p + hid_p * out_p) * 2 \
              + (2 * hid_p + out_p) * 4
    avail = int(vmem_budget * 0.75) - weights
    cap = max(_SUBLANE, (avail // per_row) // _SUBLANE * _SUBLANE)
    return max(_SUBLANE, min(block_batch, cap))


def _choose_batch_tiling(b, block_batch, min_tiles):
    """Pick (tile_batch, padded_batch) minimizing dead padded rows."""
    pb8 = _round_up(b, _SUBLANE)
    want_tiles = min_tiles if pb8 >= min_tiles * _SUBLANE else 1
    if want_tiles <= 1 and b <= block_batch:
        return b, b                                  # single unpadded tile
    max_tb = min(block_batch,
                 max(_SUBLANE, _round_up(pl.cdiv(pb8, want_tiles), _SUBLANE)))
    best_key, best = None, None
    tb = max_tb
    while tb >= _SUBLANE:
        pb = _round_up(b, tb)
        key = (pb - b, -tb)                          # least padding, then largest tile
        if best_key is None or key < best_key:
            best_key, best = key, (tb, pb)
        if pb == b:
            break
        tb -= _SUBLANE
    return best


def _mlp_kernel(x_ref, w1_ref, b1_ref, w2_ref, b2_ref, w3_ref, b3_ref, o_ref):
    # Layer 1: (TB, in_dim) @ (in_dim, 128) -> f32 acc; bias + ReLU in f32.
    # K (in_dim) is not padded to 128; Mosaic handles the non-128 K internally.
    # TODO(synk): for very large in_dim (>~12K flattened inputs) add a K-tiled
    # "arbitrary" grid axis with an f32 accumulator scratch to bound VMEM.
    h1 = jnp.dot(x_ref[...], w1_ref[...], preferred_element_type=jnp.float32)
    h1 = jnp.maximum(h1 + b1_ref[...], 0.0)
    # Layer 2: (TB, 128) @ (128, 128)
    h2 = jnp.dot(h1.astype(jnp.bfloat16), w2_ref[...],
                 preferred_element_type=jnp.float32)
    h2 = jnp.maximum(h2 + b2_ref[...], 0.0)
    # Output layer: (TB, 128) @ (128, 128); lane-dense bf16 store.
    out = jnp.dot(h2.astype(jnp.bfloat16), w3_ref[...],
                  preferred_element_type=jnp.float32)
    o_ref[...] = (out + b3_ref[...]).astype(o_ref.dtype)


def prepare_params(params):
    """Pad/cast backbone parameters ONCE (per parameter update), off the
    per-forward path. Weights -> bf16, N dims padded to 128; K of w1 unpadded;
    biases kept in f32."""
    w1, b1, w2, b2, w3, b3 = params
    in_dim, out_dim = int(w1.shape[0]), int(w3.shape[1])
    hid_p = _round_up(HIDDEN, _LANE)      # 100 -> 128
    out_p = _round_up(out_dim, _LANE)     # e.g. 10 -> 128
    bf, f32 = jnp.bfloat16, jnp.float32
    w1p = jnp.zeros((in_dim, hid_p), bf).at[:, :HIDDEN].set(w1.astype(bf))
    w2p = jnp.zeros((hid_p, hid_p), bf).at[:HIDDEN, :HIDDEN].set(w2.astype(bf))
    w3p = jnp.zeros((hid_p, out_p), bf).at[:HIDDEN, :out_dim].set(w3.astype(bf))
    b1p = jnp.zeros((1, hid_p), f32).at[:, :HIDDEN].set(b1.reshape(1, -1).astype(f32))
    b2p = jnp.zeros((1, hid_p), f32).at[:, :HIDDEN].set(b2.reshape(1, -1).astype(f32))
    b3p = jnp.zeros((1, out_p), f32).at[:, :out_dim].set(b3.reshape(1, -1).astype(f32))
    return {"weights": (w1p, b1p, w2p, b2p, w3p, b3p),
            "in_dim": in_dim, "out_dim": out_dim}


def continual_model_forward(x_nchw, prepared, *, block_batch=1024):
    """Forward pass of ContinualModel: flatten NCHW input, run fused MLP."""
    w1p, b1p, w2p, b2p, w3p, b3p = prepared["weights"]
    in_dim, out_dim = prepared["in_dim"], prepared["out_dim"]
    hid_p, out_p = w1p.shape[1], w3p.shape[1]

    b = x_nchw.shape[0]
    bf = jnp.bfloat16
    # Single pass: flatten (same order as torch .view(B, -1)) straight to bf16.
    x = x_nchw.reshape(b, -1).astype(bf)
    assert x.shape[1] == in_dim

    vmem_budget = _vmem_budget_bytes()
    bb = _cap_block_batch(block_batch, in_dim, hid_p, out_p, vmem_budget)
    tb, pb = _choose_batch_tiling(b, bb, _min_batch_tiles())
    if pb != b:                     # pad batch rows only when tiling requires it
        x = jnp.zeros((pb, in_dim), bf).at[:b].set(x)

    grid = (pb // tb,)

    def resident(shape):
        # Constant block index across the grid -> VMEM-resident, single buffer.
        return pl.BlockSpec(shape, lambda i: (0, 0), pipeline_mode=pl.Buffered(1))

    flops = 2 * pb * (in_dim * hid_p + hid_p * hid_p + hid_p * out_p)
    bytes_accessed = (pb * in_dim * 2
                      + (w1p.size + w2p.size + w3p.size) * 2
                      + (b1p.size + b2p.size + b3p.size) * 4
                      + pb * out_p * 2)

    out_padded = pl.pallas_call(
        _mlp_kernel,
        out_shape=jax.ShapeDtypeStruct((pb, out_p), jnp.bfloat16),
        grid=grid,
        in_specs=[
            pl.BlockSpec((tb, in_dim), lambda i: (i, 0)),   # activations (pipelined)
            resident(w1p.shape), resident(b1p.shape),       # layer 1
            resident(w2p.shape), resident(b2p.shape),       # layer 2
            resident(w3p.shape), resident(b3p.shape),       # layer 3
        ],
        out_specs=pl.BlockSpec((tb, out_p), lambda i: (i, 0)),
        compiler_params=pltpu.CompilerParams(
            dimension_semantics=("parallel",),
            vmem_limit_bytes=vmem_budget,
        ),
        cost_estimate=pl.CostEstimate(
            flops=flops, transcendentals=0, bytes_accessed=bytes_accessed),
    )(x, w1p, b1p, w2p, b2p, w3p, b3p)

    # Slice padded batch rows / output lanes back; cast tiny logical slice to f32.
    return out_padded[:b, :out_dim].astype(jnp.float32)


def init_params(key, in_dim, out_dim):
    """Deterministic parameter init (uniform fan-in, like torch.nn.Linear)."""
    ks = jax.random.split(key, 6)

    def lin(kw, kb, fan_in, fan_out):
        bound = 1.0 / jnp.sqrt(fan_in)
        w = jax.random.uniform(kw, (fan_in, fan_out), jnp.float32, -bound, bound)
        b = jax.random.uniform(kb, (1, fan_out), jnp.float32, -bound, bound)
        return w, b

    w1, b1 = lin(ks[0], ks[1], in_dim, HIDDEN)
    w2, b2 = lin(ks[2], ks[3], HIDDEN, HIDDEN)
    w3, b3 = lin(ks[4], ks[5], HIDDEN, out_dim)
    return (w1, b1, w2, b2, w3, b3)


def _reference_forward(x_nchw, params):
    """Pure-JAX reference with the same bf16-operand / f32-accum numerics."""
    w1, b1, w2, b2, w3, b3 = params
    x = x_nchw.reshape(x_nchw.shape[0], -1)
    bf = jnp.bfloat16
    h1 = jnp.maximum(
        jnp.dot(x.astype(bf), w1.astype(bf), preferred_element_type=jnp.float32) + b1, 0.0)
    h2 = jnp.maximum(
        jnp.dot(h1.astype(bf), w2.astype(bf), preferred_element_type=jnp.float32) + b2, 0.0)
    return jnp.dot(h2.astype(bf), w3.astype(bf),
                   preferred_element_type=jnp.float32) + b3


if __name__ == "__main__":
    key = jax.random.PRNGKey(0)
    k_x, k_p = jax.random.split(key)

    # Small shapes consistent with the module: NCHW image batch.
    B, C, H, W = 2, 4, 16, 16
    OUT_DIM = 10
    IN_DIM = C * H * W

    x = jax.random.normal(k_x, (B, C, H, W), jnp.float32)
    params = init_params(k_p, IN_DIM, OUT_DIM)

    prepared = prepare_params(params)            # once per parameter update
    fwd = jax.jit(lambda xx: continual_model_forward(xx, prepared))

    out = jax.block_until_ready(fwd(x))

    ref = _reference_forward(x, params)
    assert out.shape == (B, OUT_DIM)
    assert out.dtype == jnp.float32
    assert jnp.allclose(out, ref, atol=2e-2, rtol=2e-2), \
        f"max abs diff {jnp.max(jnp.abs(out - ref))}"

    # TODO(synk): observe()/end_task()/get_params()/get_grads() are training-time
    # utilities with no forward-pass compute; only forward() is kernelized.
    print("KERNEL_OK")
</pallas_src>

<mosaic_0001>
module attributes {stable_mosaic.version = 11 : i64} {
  func.func @_mlp_kernel(%arg0: i32, %arg1: memref<2x1024xbf16, #tpu.memory_space<vmem>>, %arg2: memref<1024x128xbf16, #tpu.memory_space<vmem>>, %arg3: memref<1x128xf32, #tpu.memory_space<vmem>>, %arg4: memref<128x128xbf16, #tpu.memory_space<vmem>>, %arg5: memref<1x128xf32, #tpu.memory_space<vmem>>, %arg6: memref<128x128xbf16, #tpu.memory_space<vmem>>, %arg7: memref<1x128xf32, #tpu.memory_space<vmem>>, %arg8: memref<2x128xbf16, #tpu.memory_space<vmem>>) attributes {dimension_semantics = [#tpu.dimension_semantics<parallel>], iteration_bounds = array<i64: 1>, scalar_prefetch = 0 : i64, scratch_operands = 0 : i64, tpu.core_type = #tpu.core_type<tc>, window_params = [{transform_indices = @transform_0, window_bounds = array<i64: 2, 1024>}, {pipeline_mode = #tpu.pipeline_mode<synchronous>, transform_indices = @transform_1, window_bounds = array<i64: 1024, 128>}, {pipeline_mode = #tpu.pipeline_mode<synchronous>, transform_indices = @transform_2, window_bounds = array<i64: 1, 128>}, {pipeline_mode = #tpu.pipeline_mode<synchronous>, transform_indices = @transform_3, window_bounds = array<i64: 128, 128>}, {pipeline_mode = #tpu.pipeline_mode<synchronous>, transform_indices = @transform_4, window_bounds = array<i64: 1, 128>}, {pipeline_mode = #tpu.pipeline_mode<synchronous>, transform_indices = @transform_5, window_bounds = array<i64: 128, 128>}, {pipeline_mode = #tpu.pipeline_mode<synchronous>, transform_indices = @transform_6, window_bounds = array<i64: 1, 128>}, {transform_indices = @transform_7, window_bounds = array<i64: 2, 128>}]} {
    %c0 = arith.constant 0 : index
    %c0_0 = arith.constant 0 : index
    %0 = vector.load %arg1[%c0, %c0_0] : memref<2x1024xbf16, #tpu.memory_space<vmem>>, vector<2x1024xbf16>
    %c0_1 = arith.constant 0 : index
    %c0_2 = arith.constant 0 : index
    %1 = vector.load %arg2[%c0_1, %c0_2] : memref<1024x128xbf16, #tpu.memory_space<vmem>>, vector<1024x128xbf16>
    %cst = arith.constant dense<0.000000e+00> : vector<2x128xf32>
    %2 = tpu.matmul %0, %1, %cst {dimension_numbers = #tpu.dot_dimension_numbers<[1], [0], [0], [1], [0, 0, 1, 1], [], []>} : vector<2x1024xbf16>, vector<1024x128xbf16>, vector<2x128xf32> -> vector<2x128xf32>
    %c0_3 = arith.constant 0 : index
    %c0_4 = arith.constant 0 : index
    %3 = vector.load %arg3[%c0_3, %c0_4] : memref<1x128xf32, #tpu.memory_space<vmem>>, vector<1x128xf32>
    %4 = vector.broadcast %3 : vector<1x128xf32> to vector<2x128xf32>
    %5 = arith.addf %2, %4 : vector<2x128xf32>
    %cst_5 = arith.constant 0.000000e+00 : f32
    %6 = vector.broadcast %cst_5 : f32 to vector<2x128xf32>
    %7 = arith.maximumf %5, %6 : vector<2x128xf32>
    %8 = arith.truncf %7 : vector<2x128xf32> to vector<2x128xbf16>
    %c0_6 = arith.constant 0 : index
    %c0_7 = arith.constant 0 : index
    %9 = vector.load %arg4[%c0_6, %c0_7] : memref<128x128xbf16, #tpu.memory_space<vmem>>, vector<128x128xbf16>
    %cst_8 = arith.constant dense<0.000000e+00> : vector<2x128xf32>
    %10 = tpu.matmul %8, %9, %cst_8 {dimension_numbers = #tpu.dot_dimension_numbers<[1], [0], [0], [1], [0, 0, 1, 1], [], []>} : vector<2x128xbf16>, vector<128x128xbf16>, vector<2x128xf32> -> vector<2x128xf32>
    %c0_9 = arith.constant 0 : index
    %c0_10 = arith.constant 0 : index
    %11 = vector.load %arg5[%c0_9, %c0_10] : memref<1x128xf32, #tpu.memory_space<vmem>>, vector<1x128xf32>
    %12 = vector.broadcast %11 : vector<1x128xf32> to vector<2x128xf32>
    %13 = arith.addf %10, %12 : vector<2x128xf32>
    %cst_11 = arith.constant 0.000000e+00 : f32
    %14 = vector.broadcast %cst_11 : f32 to vector<2x128xf32>
    %15 = arith.maximumf %13, %14 : vector<2x128xf32>
    %16 = arith.truncf %15 : vector<2x128xf32> to vector<2x128xbf16>
    %c0_12 = arith.constant 0 : index
    %c0_13 = arith.constant 0 : index
    %17 = vector.load %arg6[%c0_12, %c0_13] : memref<128x128xbf16, #tpu.memory_space<vmem>>, vector<128x128xbf16>
    %cst_14 = arith.constant dense<0.000000e+00> : vector<2x128xf32>
    %18 = tpu.matmul %16, %17, %cst_14 {dimension_numbers = #tpu.dot_dimension_numbers<[1], [0], [0], [1], [0, 0, 1, 1], [], []>} : vector<2x128xbf16>, vector<128x128xbf16>, vector<2x128xf32> -> vector<2x128xf32>
    %c0_15 = arith.constant 0 : index
    %c0_16 = arith.constant 0 : index
    %19 = vector.load %arg7[%c0_15, %c0_16] : memref<1x128xf32, #tpu.memory_space<vmem>>, vector<1x128xf32>
    %20 = vector.broadcast %19 : vector<1x128xf32> to vector<2x128xf32>
    %21 = arith.addf %18, %20 : vector<2x128xf32>
    %22 = arith.truncf %21 : vector<2x128xf32> to vector<2x128xbf16>
    %c0_17 = arith.constant 0 : index
    %c0_18 = arith.constant 0 : index
    %23 = vector.load %arg8[%c0_17, %c0_18] : memref<2x128xbf16, #tpu.memory_space<vmem>>, vector<2x128xbf16>
    tpu.vector_store %arg8[%c0_17, %c0_18], %22 {strides = array<i32>} : memref<2x128xbf16, #tpu.memory_space<vmem>>, vector<2x128xbf16>,
    return
  }
  func.func @transform_0(%arg0: i32) -> (i32, i32) {
    %c0_i32 = arith.constant 0 : i32
    %c0_i32_0 = arith.constant 0 : i32
    return %arg0, %c0_i32 : i32, i32
  }
  func.func @transform_1(%arg0: i32) -> (i32, i32) {
    %c0_i32 = arith.constant 0 : i32
    %c0_i32_0 = arith.constant 0 : i32
    %c0_i32_1 = arith.constant 0 : i32
    return %c0_i32, %c0_i32_0 : i32, i32
  }
  func.func @transform_2(%arg0: i32) -> (i32, i32) {
    %c0_i32 = arith.constant 0 : i32
    %c0_i32_0 = arith.constant 0 : i32
    %c0_i32_1 = arith.constant 0 : i32
    return %c0_i32, %c0_i32_0 : i32, i32
  }
  func.func @transform_3(%arg0: i32) -> (i32, i32) {
    %c0_i32 = arith.constant 0 : i32
    %c0_i32_0 = arith.constant 0 : i32
    %c0_i32_1 = arith.constant 0 : i32
    return %c0_i32, %c0_i32_0 : i32, i32
  }
  func.func @transform_4(%arg0: i32) -> (i32, i32) {
    %c0_i32 = arith.constant 0 : i32
    %c0_i32_0 = arith.constant 0 : i32
    %c0_i32_1 = arith.constant 0 : i32
    return %c0_i32, %c0_i32_0 : i32, i32
  }
  func.func @transform_5(%arg0: i32) -> (i32, i32) {
    %c0_i32 = arith.constant 0 : i32
    %c0_i32_0 = arith.constant 0 : i32
    %c0_i32_1 = arith.constant 0 : i32
    return %c0_i32, %c0_i32_0 : i32, i32
  }
  func.func @transform_6(%arg0: i32) -> (i32, i32) {
    %c0_i32 = arith.constant 0 : i32
    %c0_i32_0 = arith.constant 0 : i32
    %c0_i32_1 = arith.constant 0 : i32
    return %c0_i32, %c0_i32_0 : i32, i32
  }
  func.func @transform_7(%arg0: i32) -> (i32, i32) {
    %c0_i32 = arith.constant 0 : i32
    %c0_i32_0 = arith.constant 0 : i32
    return %arg0, %c0_i32 : i32, i32
  }
}

</mosaic_0001>

<llo_original>
// kernel: _lambda_.1
$region0: #{_lambda_.1}
  #allocation0 [shape = 'u32[]', space=smem, size = 0x4, offset = 0x4, fixed_abs, tag = 'smem constant byte address 0x4 - core index']
  #allocation1 [shape = 'u32[72,128]{1,0:T(1,128)}', space=vmem, size = 0x9000, scoped, tag = 'internal scratch']
  %s0 = inlined_call_operand.vmem [shape: bf16[2,1024], index: 0, kind: input, shape index: {}]
  %s1 = inlined_call_operand.hbm [shape: bf16[1024,128], index: 1, kind: input, shape index: {}]
  %s2 = inlined_call_operand.vmem [shape: f32[1,128], index: 2, kind: input, shape index: {}]
  %s3 = inlined_call_operand.vmem [shape: bf16[128,128], index: 3, kind: input, shape index: {}]
  %s4 = inlined_call_operand.vmem [shape: f32[1,128], index: 4, kind: input, shape index: {}]
  %s5 = inlined_call_operand.vmem [shape: bf16[128,128], index: 5, kind: input, shape index: {}]
  %s6 = inlined_call_operand.vmem [shape: f32[1,128], index: 6, kind: input, shape index: {}]
  %s7 = inlined_call_operand.vmem [shape: bf16[2,128], index: 7, kind: output, shape index: {}]
  %s8 = sld [smem:[#allocation0]]
  $region42: #{_lambda_.1} parent=0
    _
  %s10 = ssub.s32 1, %s8
  %s11 = scalar_select 0, %s10, %s8
  $region1: #{_lambda_.1} parent=0
    #allocation2 [shape = 'u8[262144]{0}', space=vmem, size = 0x40000, scoped, tag = 'input window, operand 1, single buffered']
    #allocation3 [shape = 's32[1]{0}', space=sflag, size = 0x4, scoped, tag = 'scoped memory for _lambda_.1']
    %12 = vsyncpa [#allocation3], 0
    // Predicated region
    $region2: #{_lambda_.1} parent=1 // pred_check
      _
    $region3: #{_lambda_.1} parent=1 // pred_check_branch
      %14 = sbr.rel (0) target = $region5
    $region4: #{_lambda_.1} parent=1 // pred_region
      _
    $region5: #{_lambda_.1} parent=1 // pred_fallthru
      _
    // Predicated region
    $region6: #{_lambda_.1} parent=1 // pred_check
      _
    $region7: #{_lambda_.1} parent=1 // pred_check_branch
      %16 = sbr.rel (0) target = $region9
    $region8: #{_lambda_.1} parent=1 // pred_region
      %18 = vsyncadd [#allocation3], 0
      %s19 = sshll.u32 %s1, 4
      %s20 = int_to_ptr.hbm [resolvable:$true] %s19
      %s21 = sshll.u32 [#allocation2], 4
      %s22 = int_to_ptr.vmem [resolvable:$true] %s21
      %27 = dma.hbm_to_vmem [thread:$0]  %s20, 8192, %s22, [#allocation3], 64, 64, 4
    $region9: #{_lambda_.1} parent=1 // pred_fallthru
      _
    // Predicated region
    $region10: #{_lambda_.1} parent=1 // pred_check
      _
    $region11: #{_lambda_.1} parent=1 // pred_check_branch
      %29 = sbr.rel (0) target = $region13
    $region12: #{_lambda_.1} parent=1 // pred_region
      _
    $region13: #{_lambda_.1} parent=1 // pred_fallthru
      _
    // Predicated region
    $region14: #{_lambda_.1} parent=1 // pred_check
      _
    $region15: #{_lambda_.1} parent=1 // pred_check_branch
      %31 = sbr.rel (0) target = $region17
    $region16: #{_lambda_.1} parent=1 // pred_region
      _
    $region17: #{_lambda_.1} parent=1 // pred_fallthru
      _
    // Predicated region
    $region18: #{_lambda_.1} parent=1 // pred_check
      _
    $region19: #{_lambda_.1} parent=1 // pred_check_branch
      %33 = sbr.rel (0) target = $region21
    $region20: #{_lambda_.1} parent=1 // pred_region
      _
    $region21: #{_lambda_.1} parent=1 // pred_fallthru
      _
    // Predicated region
    $region22: #{_lambda_.1} parent=1 // pred_check
      _
    $region23: #{_lambda_.1} parent=1 // pred_check_branch
      %35 = sbr.rel (0) target = $region25
    $region24: #{_lambda_.1} parent=1 // pred_region
      _
    $region25: #{_lambda_.1} parent=1 // pred_fallthru
      _
    // Predicated region
    $region26: #{_lambda_.1} parent=1 // pred_check
      _
    $region27: #{_lambda_.1} parent=1 // pred_check_branch
      %37 = sbr.rel (0) target = $region29
    $region28: #{_lambda_.1} parent=1 // pred_region
      _
    $region29: #{_lambda_.1} parent=1 // pred_fallthru
      _
    // Predicated region
    $region30: #{_lambda_.1} parent=1 // pred_check
      _
    $region31: #{_lambda_.1} parent=1 // pred_check_branch
      %39 = sbr.rel (0) target = $region33
    $region32: #{_lambda_.1} parent=1 // pred_region
      %41 = dma.done [#allocation3], 8192
    $region33: #{_lambda_.1} parent=1 // pred_fallthru
      _
    %v42 = vld [vmem:[%s0] sm:$0xff]
    %v43 = vld [vmem:[#allocation2] sm:$0xf]
    %v44 = vld [vmem:[#allocation2 + $0x4] sm:$0xf]
    %v45 = vld [vmem:[#allocation2 + $0x8] sm:$0xf]
    %v46 = vld [vmem:[#allocation2 + $0xc] sm:$0xf]
    %v47 = vld [vmem:[#allocation2 + $0x10] sm:$0xf]
    %v48 = vld [vmem:[#allocation2 + $0x14] sm:$0xf]
    %v49 = vld [vmem:[#allocation2 + $0x18] sm:$0xf]
    %v50 = vld [vmem:[#allocation2 + $0x1c] sm:$0xf]
    %v51 = vld [vmem:[#allocation2 + $0x20] sm:$0xf]
    %v52 = vld [vmem:[#allocation2 + $0x24] sm:$0xf]
    %v53 = vld [vmem:[#allocation2 + $0x28] sm:$0xf]
    %v54 = vld [vmem:[#allocation2 + $0x2c] sm:$0xf]
    %v55 = vld [vmem:[#allocation2 + $0x30] sm:$0xf]
    %v56 = vld [vmem:[#allocation2 + $0x34] sm:$0xf]
    %v57 = vld [vmem:[#allocation2 + $0x38] sm:$0xf]
    %v58 = vld [vmem:[#allocation2 + $0x3c] sm:$0xf]
    %v59 = vld [vmem:[#allocation2 + $0x40] sm:$0xf]
    %v60 = vld [vmem:[#allocation2 + $0x44] sm:$0xf]
    %v61 = vld [vmem:[#allocation2 + $0x48] sm:$0xf]
    %v62 = vld [vmem:[#allocation2 + $0x4c] sm:$0xf]
    %v63 = vld [vmem:[#allocation2 + $0x50] sm:$0xf]
    %v64 = vld [vmem:[#allocation2 + $0x54] sm:$0xf]
    %v65 = vld [vmem:[#allocation2 + $0x58] sm:$0xf]
    %v66 = vld [vmem:[#allocation2 + $0x5c] sm:$0xf]
    %v67 = vld [vmem:[#allocation2 + $0x60] sm:$0xf]
    %v68 = vld [vmem:[#allocation2 + $0x64] sm:$0xf]
    %v69 = vld [vmem:[#allocation2 + $0x68] sm:$0xf]
    %v70 = vld [vmem:[#allocation2 + $0x6c] sm:$0xf]
    %v71 = vld [vmem:[#allocation2 + $0x70] sm:$0xf]
    %v72 = vld [vmem:[#allocation2 + $0x74] sm:$0xf]
    %v73 = vld [vmem:[#allocation2 + $0x78] sm:$0xf]
    %v74 = vld [vmem:[#allocation2 + $0x7c] sm:$0xf]
    %v75 = vld [vmem:[#allocation2 + $0x80] sm:$0xf]
    %v76 = vld [vmem:[#allocation2 + $0x84] sm:$0xf]
    %v77 = vld [vmem:[#allocation2 + $0x88] sm:$0xf]
    %v78 = vld [vmem:[#allocation2 + $0x8c] sm:$0xf]
    %v79 = vld [vmem:[#allocation2 + $0x90] sm:$0xf]
    %v80 = vld [vmem:[#allocation2 + $0x94] sm:$0xf]
    %v81 = vld [vmem:[#allocation2 + $0x98] sm:$0xf]
    %v82 = vld [vmem:[#allocation2 + $0x9c] sm:$0xf]
    %v83 = vld [vmem:[#allocation2 + $0xa0] sm:$0xf]
    %v84 = vld [vmem:[#allocation2 + $0xa4] sm:$0xf]
    %v85 = vld [vmem:[#allocation2 + $0xa8] sm:$0xf]
    %v86 = vld [vmem:[#allocation2 + $0xac] sm:$0xf]
    %v87 = vld [vmem:[#allocation2 + $0xb0] sm:$0xf]
    %v88 = vld [vmem:[#allocation2 + $0xb4] sm:$0xf]
    %v89 = vld [vmem:[#allocation2 + $0xb8] sm:$0xf]
    %v90 = vld [vmem:[#allocation2 + $0xbc] sm:$0xf]
    %v91 = vld [vmem:[#allocation2 + $0xc0] sm:$0xf]
    %v92 = vld [vmem:[#allocation2 + $0xc4] sm:$0xf]
    %v93 = vld [vmem:[#allocation2 + $0xc8] sm:$0xf]
    %v94 = vld [vmem:[#allocation2 + $0xcc] sm:$0xf]
    %v95 = vld [vmem:[#allocation2 + $0xd0] sm:$0xf]
    %v96 = vld [vmem:[#allocation2 + $0xd4] sm:$0xf]
    %v97 = vld [vmem:[#allocation2 + $0xd8] sm:$0xf]
    %v98 = vld [vmem:[#allocation2 + $0xdc] sm:$0xf]
    %v99 = vld [vmem:[#allocation2 + $0xe0] sm:$0xf]
    %v100 = vld [vmem:[#allocation2 + $0xe4] sm:$0xf]
    %v101 = vld [vmem:[#allocation2 + $0xe8] sm:$0xf]
    %v102 = vld [vmem:[#allocation2 + $0xec] sm:$0xf]
    %v103 = vld [vmem:[#allocation2 + $0xf0] sm:$0xf]
    %v104 = vld [vmem:[#allocation2 + $0xf4] sm:$0xf]
    %v105 = vld [vmem:[#allocation2 + $0xf8] sm:$0xf]
    %v106 = vld [vmem:[#allocation2 + $0xfc] sm:$0xf]
    %v107 = vld [vmem:[#allocation2 + $0x100] sm:$0xf]
    %v108 = vld [vmem:[#allocation2 + $0x104] sm:$0xf]
    %v109 = vld [vmem:[#allocation2 + $0x108] sm:$0xf]
    %v110 = vld [vmem:[#allocation2 + $0x10c] sm:$0xf]
    %v111 = vld [vmem:[#allocation2 + $0x110] sm:$0xf]
    %v112 = vld [vmem:[#allocation2 + $0x114] sm:$0xf]
    %v113 = vld [vmem:[#allocation2 + $0x118] sm:$0xf]
    %v114 = vld [vmem:[#allocation2 + $0x11c] sm:$0xf]
    %v115 = vld [vmem:[#allocation2 + $0x120] sm:$0xf]
    %v116 = vld [vmem:[#allocation2 + $0x124] sm:$0xf]
    %v117 = vld [vmem:[#allocation2 + $0x128] sm:$0xf]
    %v118 = vld [vmem:[#allocation2 + $0x12c] sm:$0xf]
    %v119 = vld [vmem:[#allocation2 + $0x130] sm:$0xf]
    %v120 = vld [vmem:[#allocation2 + $0x134] sm:$0xf]
    %v121 = vld [vmem:[#allocation2 + $0x138] sm:$0xf]
    %v122 = vld [vmem:[#allocation2 + $0x13c] sm:$0xf]
    %v123 = vld [vmem:[#allocation2 + $0x140] sm:$0xf]
    %v124 = vld [vmem:[#allocation2 + $0x144] sm:$0xf]
    %v125 = vld [vmem:[#allocation2 + $0x148] sm:$0xf]
    %v126 = vld [vmem:[#allocation2 + $0x14c] sm:$0xf]
    %v127 = vld [vmem:[#allocation2 + $0x150] sm:$0xf]
    %v128 = vld [vmem:[#allocation2 + $0x154] sm:$0xf]
    %v129 = vld [vmem:[#allocation2 + $0x158] sm:$0xf]
    %v130 = vld [vmem:[#allocation2 + $0x15c] sm:$0xf]
    %v131 = vld [vmem:[#allocation2 + $0x160] sm:$0xf]
    %v132 = vld [vmem:[#allocation2 + $0x164] sm:$0xf]
    %v133 = vld [vmem:[#allocation2 + $0x168] sm:$0xf]
    %v134 = vld [vmem:[#allocation2 + $0x16c] sm:$0xf]
    %v135 = vld [vmem:[#allocation2 + $0x170] sm:$0xf]
    %v136 = vld [vmem:[#allocation2 + $0x174] sm:$0xf]
    %v137 = vld [vmem:[#allocation2 + $0x178] sm:$0xf]
    %v138 = vld [vmem:[#allocation2 + $0x17c] sm:$0xf]
    %v139 = vld [vmem:[#allocation2 + $0x180] sm:$0xf]
    %v140 = vld [vmem:[#allocation2 + $0x184] sm:$0xf]
    %v141 = vld [vmem:[#allocation2 + $0x188] sm:$0xf]
    %v142 = vld [vmem:[#allocation2 + $0x18c] sm:$0xf]
    %v143 = vld [vmem:[#allocation2 + $0x190] sm:$0xf]
    %v144 = vld [vmem:[#allocation2 + $0x194] sm:$0xf]
    %v145 = vld [vmem:[#allocation2 + $0x198] sm:$0xf]
    %v146 = vld [vmem:[#allocation2 + $0x19c] sm:$0xf]
    %v147 = vld [vmem:[#allocation2 + $0x1a0] sm:$0xf]
    %v148 = vld [vmem:[#allocation2 + $0x1a4] sm:$0xf]
    %v149 = vld [vmem:[#allocation2 + $0x1a8] sm:$0xf]
    %v150 = vld [vmem:[#allocation2 + $0x1ac] sm:$0xf]
    %v151 = vld [vmem:[#allocation2 + $0x1b0] sm:$0xf]
    %v152 = vld [vmem:[#allocation2 + $0x1b4] sm:$0xf]
    %v153 = vld [vmem:[#allocation2 + $0x1b8] sm:$0xf]
    %v154 = vld [vmem:[#allocation2 + $0x1bc] sm:$0xf]
    %v155 = vld [vmem:[#allocation2 + $0x1c0] sm:$0xf]
    %v156 = vld [vmem:[#allocation2 + $0x1c4] sm:$0xf]
    %v157 = vld [vmem:[#allocation2 + $0x1c8] sm:$0xf]
    %v158 = vld [vmem:[#allocation2 + $0x1cc] sm:$0xf]
    %v159 = vld [vmem:[#allocation2 + $0x1d0] sm:$0xf]
    %v160 = vld [vmem:[#allocation2 + $0x1d4] sm:$0xf]
    %v161 = vld [vmem:[#allocation2 + $0x1d8] sm:$0xf]
    %v162 = vld [vmem:[#allocation2 + $0x1dc] sm:$0xf]
    %v163 = vld [vmem:[#allocation2 + $0x1e0] sm:$0xf]
    %v164 = vld [vmem:[#allocation2 + $0x1e4] sm:$0xf]
    %v165 = vld [vmem:[#allocation2 + $0x1e8] sm:$0xf]
    %v166 = vld [vmem:[#allocation2 + $0x1ec] sm:$0xf]
    %v167 = vld [vmem:[#allocation2 + $0x1f0] sm:$0xf]
    %v168 = vld [vmem:[#allocation2 + $0x1f4] sm:$0xf]
    %v169 = vld [vmem:[#allocation2 + $0x1f8] sm:$0xf]
    %v170 = vld [vmem:[#allocation2 + $0x1fc] sm:$0xf]
    %v171 = vld [vmem:[%s2] sm:$0x1]
    %v173 = vperm.slane %v171, 0
    %176 = vst [vmem:[#allocation1] ss:$9 sm:$0xff] %v42
    %v177 = vld [vmem:[#allocation1] sm:$0xff]
    %v178 = vld [vmem:[#allocation1 + $0x9] sm:$0xff]
    %v179 = vld [vmem:[#allocation1 + $0x12] sm:$0xff]
    %v180 = vld [vmem:[#allocation1 + $0x1b] sm:$0xff]
    %v181 = vld [vmem:[#allocation1 + $0x24] sm:$0xff]
    %v182 = vld [vmem:[#allocation1 + $0x2d] sm:$0xff]
    %v183 = vld [vmem:[#allocation1 + $0x36] sm:$0xff]
    %v184 = vld [vmem:[#allocation1 + $0x3f] sm:$0xff]
    %v321 = vunpack.c.l.b16 %v43
    %v322 = vunpack.c.l.b16 %v44
    %v323 = vunpack.c.l.b16 %v45
    %v324 = vunpack.c.l.b16 %v46
    %v325 = vunpack.c.l.b16 %v47
    %v326 = vunpack.c.l.b16 %v48
    %v327 = vunpack.c.l.b16 %v49
    %v328 = vunpack.c.l.b16 %v50
    %v329 = vunpack.c.l.b16 %v51
    %v330 = vunpack.c.l.b16 %v52
    %v331 = vunpack.c.l.b16 %v53
    %v332 = vunpack.c.l.b16 %v54
    %v333 = vunpack.c.l.b16 %v55
    %v334 = vunpack.c.l.b16 %v56
    %v335 = vunpack.c.l.b16 %v57
    %v336 = vunpack.c.l.b16 %v58
    %v337 = vunpack.c.l.b16 %v59
    %v338 = vunpack.c.l.b16 %v60
    %v339 = vunpack.c.l.b16 %v61
    %v340 = vunpack.c.l.b16 %v62
    %v341 = vunpack.c.l.b16 %v63
    %v342 = vunpack.c.l.b16 %v64
    %v343 = vunpack.c.l.b16 %v65
    %v344 = vunpack.c.l.b16 %v66
    %v345 = vunpack.c.l.b16 %v67
    %v346 = vunpack.c.l.b16 %v68
    %v347 = vunpack.c.l.b16 %v69
    %v348 = vunpack.c.l.b16 %v70
    %v349 = vunpack.c.l.b16 %v71
    %v350 = vunpack.c.l.b16 %v72
    %v351 = vunpack.c.l.b16 %v73
    %v352 = vunpack.c.l.b16 %v74
    %v353 = vunpack.c.l.b16 %v75
    %v354 = vunpack.c.l.b16 %v76
    %v355 = vunpack.c.l.b16 %v77
    %v356 = vunpack.c.l.b16 %v78
    %v357 = vunpack.c.l.b16 %v79
    %v358 = vunpack.c.l.b16 %v80
    %v359 = vunpack.c.l.b16 %v81
    %v360 = vunpack.c.l.b16 %v82
    %v361 = vunpack.c.l.b16 %v83
    %v362 = vunpack.c.l.b16 %v84
    %v363 = vunpack.c.l.b16 %v85
    %v364 = vunpack.c.l.b16 %v86
    %v365 = vunpack.c.l.b16 %v87
    %v366 = vunpack.c.l.b16 %v88
    %v367 = vunpack.c.l.b16 %v89
    %v368 = vunpack.c.l.b16 %v90
    %v369 = vunpack.c.l.b16 %v91
    %v370 = vunpack.c.l.b16 %v92
    %v371 = vunpack.c.l.b16 %v93
    %v372 = vunpack.c.l.b16 %v94
    %v373 = vunpack.c.l.b16 %v95
    %v374 = vunpack.c.l.b16 %v96
    %v375 = vunpack.c.l.b16 %v97
    %v376 = vunpack.c.l.b16 %v98
    %v377 = vunpack.c.l.b16 %v99
    %v378 = vunpack.c.l.b16 %v100
    %v379 = vunpack.c.l.b16 %v101
    %v380 = vunpack.c.l.b16 %v102
    %v381 = vunpack.c.l.b16 %v103
    %v382 = vunpack.c.l.b16 %v104
    %v383 = vunpack.c.l.b16 %v105
    %v384 = vunpack.c.l.b16 %v106
    %v385 = vunpack.c.l.b16 %v107
    %v386 = vunpack.c.l.b16 %v108
    %v387 = vunpack.c.l.b16 %v109
    %v388 = vunpack.c.l.b16 %v110
    %v389 = vunpack.c.l.b16 %v111
    %v390 = vunpack.c.l.b16 %v112
    %v391 = vunpack.c.l.b16 %v113
    %v392 = vunpack.c.l.b16 %v114
    %v393 = vunpack.c.l.b16 %v115
    %v394 = vunpack.c.l.b16 %v116
    %v395 = vunpack.c.l.b16 %v117
    %v396 = vunpack.c.l.b16 %v118
    %v397 = vunpack.c.l.b16 %v119
    %v398 = vunpack.c.l.b16 %v120
    %v399 = vunpack.c.l.b16 %v121
    %v400 = vunpack.c.l.b16 %v122
    %v401 = vunpack.c.l.b16 %v123
    %v402 = vunpack.c.l.b16 %v124
    %v403 = vunpack.c.l.b16 %v125
    %v404 = vunpack.c.l.b16 %v126
    %v405 = vunpack.c.l.b16 %v127
    %v406 = vunpack.c.l.b16 %v128
    %v407 = vunpack.c.l.b16 %v129
    %v408 = vunpack.c.l.b16 %v130
    %v409 = vunpack.c.l.b16 %v131
    %v410 = vunpack.c.l.b16 %v132
    %v411 = vunpack.c.l.b16 %v133
    %v412 = vunpack.c.l.b16 %v134
    %v413 = vunpack.c.l.b16 %v135
    %v414 = vunpack.c.l.b16 %v136
    %v415 = vunpack.c.l.b16 %v137
    %v416 = vunpack.c.l.b16 %v138
    %v417 = vunpack.c.l.b16 %v139
    %v418 = vunpack.c.l.b16 %v140
    %v419 = vunpack.c.l.b16 %v141
    %v420 = vunpack.c.l.b16 %v142
    %v421 = vunpack.c.l.b16 %v143
    %v422 = vunpack.c.l.b16 %v144
    %v423 = vunpack.c.l.b16 %v145
    %v424 = vunpack.c.l.b16 %v146
    %v425 = vunpack.c.l.b16 %v147
    %v426 = vunpack.c.l.b16 %v148
    %v427 = vunpack.c.l.b16 %v149
    %v428 = vunpack.c.l.b16 %v150
    %v429 = vunpack.c.l.b16 %v151
    %v430 = vunpack.c.l.b16 %v152
    %v431 = vunpack.c.l.b16 %v153
    %v432 = vunpack.c.l.b16 %v154
    %v433 = vunpack.c.l.b16 %v155
    %v434 = vunpack.c.l.b16 %v156
    %v435 = vunpack.c.l.b16 %v157
    %v436 = vunpack.c.l.b16 %v158
    %v437 = vunpack.c.l.b16 %v159
    %v438 = vunpack.c.l.b16 %v160
    %v439 = vunpack.c.l.b16 %v161
    %v440 = vunpack.c.l.b16 %v162
    %v441 = vunpack.c.l.b16 %v163
    %v442 = vunpack.c.l.b16 %v164
    %v443 = vunpack.c.l.b16 %v165
    %v444 = vunpack.c.l.b16 %v166
    %v445 = vunpack.c.l.b16 %v167
    %v446 = vunpack.c.l.b16 %v168
    %v447 = vunpack.c.l.b16 %v169
    %v448 = vunpack.c.l.b16 %v170
    %v449 = vpack.c.b16 %v322, %v321
    %v450 = vpack.c.b16 %v324, %v323
    %v451 = vpack.c.b16 %v326, %v325
    %v452 = vpack.c.b16 %v328, %v327
    %v453 = vpack.c.b16 %v330, %v329
    %v454 = vpack.c.b16 %v332, %v331
    %v455 = vpack.c.b16 %v334, %v333
    %v456 = vpack.c.b16 %v336, %v335
    %v457 = vpack.c.b16 %v338, %v337
    %v458 = vpack.c.b16 %v340, %v339
    %v459 = vpack.c.b16 %v342, %v341
    %v460 = vpack.c.b16 %v344, %v343
    %v461 = vpack.c.b16 %v346, %v345
    %v462 = vpack.c.b16 %v348, %v347
    %v463 = vpack.c.b16 %v350, %v349
    %v464 = vpack.c.b16 %v352, %v351
    %v465 = vpack.c.b16 %v354, %v353
    %v466 = vpack.c.b16 %v356, %v355
    %v467 = vpack.c.b16 %v358, %v357
    %v468 = vpack.c.b16 %v360, %v359
    %v469 = vpack.c.b16 %v362, %v361
    %v470 = vpack.c.b16 %v364, %v363
    %v471 = vpack.c.b16 %v366, %v365
    %v472 = vpack.c.b16 %v368, %v367
    %v473 = vpack.c.b16 %v370, %v369
    %v474 = vpack.c.b16 %v372, %v371
    %v475 = vpack.c.b16 %v374, %v373
    %v476 = vpack.c.b16 %v376, %v375
    %v477 = vpack.c.b16 %v378, %v377
    %v478 = vpack.c.b16 %v380, %v379
    %v479 = vpack.c.b16 %v382, %v381
    %v480 = vpack.c.b16 %v384, %v383
    %v481 = vpack.c.b16 %v386, %v385
    %v482 = vpack.c.b16 %v388, %v387
    %v483 = vpack.c.b16 %v390, %v389
    %v484 = vpack.c.b16 %v392, %v391
    %v485 = vpack.c.b16 %v394, %v393
    %v486 = vpack.c.b16 %v396, %v395
    %v487 = vpack.c.b16 %v398, %v397
    %v488 = vpack.c.b16 %v400, %v399
    %v489 = vpack.c.b16 %v402, %v401
    %v490 = vpack.c.b16 %v404, %v403
    %v491 = vpack.c.b16 %v406, %v405
    %v492 = vpack.c.b16 %v408, %v407
    %v493 = vpack.c.b16 %v410, %v409
    %v494 = vpack.c.b16 %v412, %v411
    %v495 = vpack.c.b16 %v414, %v413
    %v496 = vpack.c.b16 %v416, %v415
    %v497 = vpack.c.b16 %v418, %v417
    %v498 = vpack.c.b16 %v420, %v419
    %v499 = vpack.c.b16 %v422, %v421
    %v500 = vpack.c.b16 %v424, %v423
    %v501 = vpack.c.b16 %v426, %v425
    %v502 = vpack.c.b16 %v428, %v427
    %v503 = vpack.c.b16 %v430, %v429
    %v504 = vpack.c.b16 %v432, %v431
    %v505 = vpack.c.b16 %v434, %v433
    %v506 = vpack.c.b16 %v436, %v435
    %v507 = vpack.c.b16 %v438, %v437
    %v508 = vpack.c.b16 %v440, %v439
    %v509 = vpack.c.b16 %v442, %v441
    %v510 = vpack.c.b16 %v444, %v443
    %v511 = vpack.c.b16 %v446, %v445
    %v512 = vpack.c.b16 %v448, %v447
    %577 = vmatpush.bf16.msra.mxu0 %v456
    %578 = vmatpush.bf16.msra.mxu0 %v455
    %579 = vmatpush.bf16.msra.mxu0 %v454
    %580 = vmatpush.bf16.msra.mxu0 %v453
    %581 = vmatpush.bf16.msra.mxu0 %v452
    %582 = vmatpush.bf16.msra.mxu0 %v451
    %583 = vmatpush.bf16.msra.mxu0 %v450
    %584 = vmatpush.bf16.msra.mxu0 %v449
    %585 = vmatmul.bf16.gmra.mxu0 %v177
    %v586 = vpop.f32.mrf.mxu0
    %v587 = vadd.f32 %v173, %v586
    %v588 = vpop.f32.mrf.mxu0
    %589 = vdwg.mxu0
    %590 = vmatpush.bf16.msra.mxu0 %v464
    %591 = vmatpush.bf16.msra.mxu0 %v463
    %592 = vmatpush.bf16.msra.mxu0 %v462
    %593 = vmatpush.bf16.msra.mxu0 %v461
    %594 = vmatpush.bf16.msra.mxu0 %v460
    %595 = vmatpush.bf16.msra.mxu0 %v459
    %596 = vmatpush.bf16.msra.mxu0 %v458
    %597 = vmatpush.bf16.msra.mxu0 %v457
    %598 = vmatmul.bf16.gmra.mxu0 %v178
    %v599 = vpop.f32.mrf.mxu0
    %v600 = vadd.f32 %v587, %v599
    %v601 = vpop.f32.mrf.mxu0
    %602 = vdwg.mxu0
    %603 = vmatpush.bf16.msra.mxu0 %v472
    %604 = vmatpush.bf16.msra.mxu0 %v471
    %605 = vmatpush.bf16.msra.mxu0 %v470
    %606 = vmatpush.bf16.msra.mxu0 %v469
    %607 = vmatpush.bf16.msra.mxu0 %v468
    %608 = vmatpush.bf16.msra.mxu0 %v467
    %609 = vmatpush.bf16.msra.mxu0 %v466
    %610 = vmatpush.bf16.msra.mxu0 %v465
    %611 = vmatmul.bf16.gmra.mxu0 %v179
    %v612 = vpop.f32.mrf.mxu0
    %v613 = vadd.f32 %v600, %v612
    %v614 = vpop.f32.mrf.mxu0
    %615 = vdwg.mxu0
    %616 = vmatpush.bf16.msra.mxu0 %v480
    %617 = vmatpush.bf16.msra.mxu0 %v479
    %618 = vmatpush.bf16.msra.mxu0 %v478
    %619 = vmatpush.bf16.msra.mxu0 %v477
    %620 = vmatpush.bf16.msra.mxu0 %v476
    %621 = vmatpush.bf16.msra.mxu0 %v475
    %622 = vmatpush.bf16.msra.mxu0 %v474
    %623 = vmatpush.bf16.msra.mxu0 %v473
    %624 = vmatmul.bf16.gmra.mxu0 %v180
    %v625 = vpop.f32.mrf.mxu0
    %v626 = vadd.f32 %v613, %v625
    %v627 = vpop.f32.mrf.mxu0
    %628 = vdwg.mxu0
    %629 = vmatpush.bf16.msra.mxu0 %v488
    %630 = vmatpush.bf16.msra.mxu0 %v487
    %631 = vmatpush.bf16.msra.mxu0 %v486
    %632 = vmatpush.bf16.msra.mxu0 %v485
    %633 = vmatpush.bf16.msra.mxu0 %v484
    %634 = vmatpush.bf16.msra.mxu0 %v483
    %635 = vmatpush.bf16.msra.mxu0 %v482
    %636 = vmatpush.bf16.msra.mxu0 %v481
    %637 = vmatmul.bf16.gmra.mxu0 %v181
    %v638 = vpop.f32.mrf.mxu0
    %v639 = vadd.f32 %v626, %v638
    %v640 = vpop.f32.mrf.mxu0
    %641 = vdwg.mxu0
    %642 = vmatpush.bf16.msra.mxu0 %v496
    %643 = vmatpush.bf16.msra.mxu0 %v495
    %644 = vmatpush.bf16.msra.mxu0 %v494
    %645 = vmatpush.bf16.msra.mxu0 %v493
    %646 = vmatpush.bf16.msra.mxu0 %v492
    %647 = vmatpush.bf16.msra.mxu0 %v491
    %648 = vmatpush.bf16.msra.mxu0 %v490
    %649 = vmatpush.bf16.msra.mxu0 %v489
    %650 = vmatmul.bf16.gmra.mxu0 %v182
    %v651 = vpop.f32.mrf.mxu0
    %v652 = vadd.f32 %v639, %v651
    %v653 = vpop.f32.mrf.mxu0
    %654 = vdwg.mxu0
    %655 = vmatpush.bf16.msra.mxu0 %v504
    %656 = vmatpush.bf16.msra.mxu0 %v503
    %657 = vmatpush.bf16.msra.mxu0 %v502
    %658 = vmatpush.bf16.msra.mxu0 %v501
    %659 = vmatpush.bf16.msra.mxu0 %v500
    %660 = vmatpush.bf16.msra.mxu0 %v499
    %661 = vmatpush.bf16.msra.mxu0 %v498
    %662 = vmatpush.bf16.msra.mxu0 %v497
    %663 = vmatmul.bf16.gmra.mxu0 %v183
    %v664 = vpop.f32.mrf.mxu0
    %v665 = vadd.f32 %v652, %v664
    %v666 = vpop.f32.mrf.mxu0
    %667 = vdwg.mxu0
    %668 = vmatpush.bf16.msra.mxu0 %v512
    %669 = vmatpush.bf16.msra.mxu0 %v511
    %670 = vmatpush.bf16.msra.mxu0 %v510
    %671 = vmatpush.bf16.msra.mxu0 %v509
    %672 = vmatpush.bf16.msra.mxu0 %v508
    %673 = vmatpush.bf16.msra.mxu0 %v507
    %674 = vmatpush.bf16.msra.mxu0 %v506
    %675 = vmatpush.bf16.msra.mxu0 %v505
    %676 = vmatmul.bf16.gmra.mxu0 %v184
    %v677 = vpop.f32.mrf.mxu0
    %v678 = vadd.f32 %v665, %v677
    %v679 = vpop.f32.mrf.mxu0
    %680 = vdwg.mxu0
    %v681 = vmax.f32 %v678, 0.0
    %v682 = vpack.c.bf16 %v681, %v681
    %v683 = vld [vmem:[%s3] sm:$0xf]
    %v684 = vld [vmem:[%s3 + $0x4] sm:$0xf]
    %v685 = vld [vmem:[%s3 + $0x8] sm:$0xf]
    %v686 = vld [vmem:[%s3 + $0xc] sm:$0xf]
    %v687 = vld [vmem:[%s3 + $0x10] sm:$0xf]
    %v688 = vld [vmem:[%s3 + $0x14] sm:$0xf]
    %v689 = vld [vmem:[%s3 + $0x18] sm:$0xf]
    %v690 = vld [vmem:[%s3 + $0x1c] sm:$0xf]
    %v691 = vld [vmem:[%s3 + $0x20] sm:$0xf]
    %v692 = vld [vmem:[%s3 + $0x24] sm:$0xf]
    %v693 = vld [vmem:[%s3 + $0x28] sm:$0xf]
    %v694 = vld [vmem:[%s3 + $0x2c] sm:$0xf]
    %v695 = vld [vmem:[%s3 + $0x30] sm:$0xf]
    %v696 = vld [vmem:[%s3 + $0x34] sm:$0xf]
    %v697 = vld [vmem:[%s3 + $0x38] sm:$0xf]
    %v698 = vld [vmem:[%s3 + $0x3c] sm:$0xf]
    %v699 = vld [vmem:[%s4] sm:$0x1]
    %v701 = vperm.slane %v699, 0
    %v719 = vunpack.c.l.b16 %v683
    %v720 = vunpack.c.l.b16 %v684
    %v721 = vunpack.c.l.b16 %v685
    %v722 = vunpack.c.l.b16 %v686
    %v723 = vunpack.c.l.b16 %v687
    %v724 = vunpack.c.l.b16 %v688
    %v725 = vunpack.c.l.b16 %v689
    %v726 = vunpack.c.l.b16 %v690
    %v727 = vunpack.c.l.b16 %v691
    %v728 = vunpack.c.l.b16 %v692
    %v729 = vunpack.c.l.b16 %v693
    %v730 = vunpack.c.l.b16 %v694
    %v731 = vunpack.c.l.b16 %v695
    %v732 = vunpack.c.l.b16 %v696
    %v733 = vunpack.c.l.b16 %v697
    %v734 = vunpack.c.l.b16 %v698
    %v735 = vpack.c.b16 %v720, %v719
    %v736 = vpack.c.b16 %v722, %v721
    %v737 = vpack.c.b16 %v724, %v723
    %v738 = vpack.c.b16 %v726, %v725
    %v739 = vpack.c.b16 %v728, %v727
    %v740 = vpack.c.b16 %v730, %v729
    %v741 = vpack.c.b16 %v732, %v731
    %v742 = vpack.c.b16 %v734, %v733
    %751 = vmatpush.bf16.msra.mxu0 %v742
    %752 = vmatpush.bf16.msra.mxu0 %v741
    %753 = vmatpush.bf16.msra.mxu0 %v740
    %754 = vmatpush.bf16.msra.mxu0 %v739
    %755 = vmatpush.bf16.msra.mxu0 %v738
    %756 = vmatpush.bf16.msra.mxu0 %v737
    %757 = vmatpush.bf16.msra.mxu0 %v736
    %758 = vmatpush.bf16.msra.mxu0 %v735
    %759 = vmatmul.bf16.gmra.mxu0 %v682
    %v760 = vpop.f32.mrf.mxu0
    %v761 = vadd.f32 %v701, %v760
    %v762 = vpop.f32.mrf.mxu0
    %763 = vdwg.mxu0
    %v764 = vmax.f32 %v761, 0.0
    %v765 = vpack.c.bf16 %v764, %v764
    %v766 = vld [vmem:[%s5] sm:$0xf]
    %v767 = vld [vmem:[%s5 + $0x4] sm:$0xf]
    %v768 = vld [vmem:[%s5 + $0x8] sm:$0xf]
    %v769 = vld [vmem:[%s5 + $0xc] sm:$0xf]
    %v770 = vld [vmem:[%s5 + $0x10] sm:$0xf]
    %v771 = vld [vmem:[%s5 + $0x14] sm:$0xf]
    %v772 = vld [vmem:[%s5 + $0x18] sm:$0xf]
    %v773 = vld [vmem:[%s5 + $0x1c] sm:$0xf]
    %v774 = vld [vmem:[%s5 + $0x20] sm:$0xf]
    %v775 = vld [vmem:[%s5 + $0x24] sm:$0xf]
    %v776 = vld [vmem:[%s5 + $0x28] sm:$0xf]
    %v777 = vld [vmem:[%s5 + $0x2c] sm:$0xf]
    %v778 = vld [vmem:[%s5 + $0x30] sm:$0xf]
    %v779 = vld [vmem:[%s5 + $0x34] sm:$0xf]
    %v780 = vld [vmem:[%s5 + $0x38] sm:$0xf]
    %v781 = vld [vmem:[%s5 + $0x3c] sm:$0xf]
    %v782 = vld [vmem:[%s6] sm:$0x1]
    %v784 = vperm.slane %v782, 0
    %v802 = vunpack.c.l.b16 %v766
    %v803 = vunpack.c.l.b16 %v767
    %v804 = vunpack.c.l.b16 %v768
    %v805 = vunpack.c.l.b16 %v769
    %v806 = vunpack.c.l.b16 %v770
    %v807 = vunpack.c.l.b16 %v771
    %v808 = vunpack.c.l.b16 %v772
    %v809 = vunpack.c.l.b16 %v773
    %v810 = vunpack.c.l.b16 %v774
    %v811 = vunpack.c.l.b16 %v775
    %v812 = vunpack.c.l.b16 %v776
    %v813 = vunpack.c.l.b16 %v777
    %v814 = vunpack.c.l.b16 %v778
    %v815 = vunpack.c.l.b16 %v779
    %v816 = vunpack.c.l.b16 %v780
    %v817 = vunpack.c.l.b16 %v781
    %v818 = vpack.c.b16 %v803, %v802
    %v819 = vpack.c.b16 %v805, %v804
    %v820 = vpack.c.b16 %v807, %v806
    %v821 = vpack.c.b16 %v809, %v808
    %v822 = vpack.c.b16 %v811, %v810
    %v823 = vpack.c.b16 %v813, %v812
    %v824 = vpack.c.b16 %v815, %v814
    %v825 = vpack.c.b16 %v817, %v816
    %834 = vmatpush.bf16.msra.mxu0 %v825
    %835 = vmatpush.bf16.msra.mxu0 %v824
    %836 = vmatpush.bf16.msra.mxu0 %v823
    %837 = vmatpush.bf16.msra.mxu0 %v822
    %838 = vmatpush.bf16.msra.mxu0 %v821
    %839 = vmatpush.bf16.msra.mxu0 %v820
    %840 = vmatpush.bf16.msra.mxu0 %v819
    %841 = vmatpush.bf16.msra.mxu0 %v818
    %842 = vmatmul.bf16.gmra.mxu0 %v765
    %v843 = vpop.f32.mrf.mxu0
    %v844 = vadd.f32 %v784, %v843
    %v845 = vpop.f32.mrf.mxu0
    %846 = vdwg.mxu0
    %v847 = vpack.c.bf16 %v844, %v844
    %848 = vst [vmem:[%s7] sm:$0x1] %v847
    // Predicated region
    $region34: #{_lambda_.1} parent=1 // pred_check
      _
    $region35: #{_lambda_.1} parent=1 // pred_check_branch
      %850 = sbr.rel (0) target = $region37
    $region36: #{_lambda_.1} parent=1 // pred_region
      _
    $region37: #{_lambda_.1} parent=1 // pred_fallthru
      _
    // Predicated region
    $region38: #{_lambda_.1} parent=1 // pred_check
      _
    $region39: #{_lambda_.1} parent=1 // pred_check_branch
      %852 = sbr.rel (0) target = $region41
    $region40: #{_lambda_.1} parent=1 // pred_region
      _
    $region41: #{_lambda_.1} parent=1 // pred_fallthru
      _
    %853 = vsyncpa [#allocation3], 1

</llo_original>
